<compile_context>
chip_gen: v6e
topology: v6e:2x2x1
jax: 0.10.0
libtpu: 0.0.40
codegen_flags: <defaults>
</compile_context>

<pallas_src>
import math

import numpy as np
import jax
import jax.numpy as jnp
from jax.experimental import pallas as pl
from jax.experimental.pallas import tpu as pltpu

_LANE = 128
_TWO_PI = 2.0 * math.pi
_MAX_SHARED_TILE = 16384  # largest period-aligned tile we allow for the resident operator


def _round_up(x, m):
    return ((x + m - 1) // m) * m


def _exact_f32_dot(a, b):
    """f32-accurate matmul that does not rely on MXU precision flags.

    Splits both operands into bf16 hi/lo parts so every pass is exact even if the
    MXU demotes f32 inputs to bf16 (classic bf16x multi-pass scheme); accumulation
    is in f32 via preferred_element_type.
    """
    a_hi = a.astype(jnp.bfloat16).astype(jnp.float32)
    a_lo = a - a_hi
    b_hi = b.astype(jnp.bfloat16).astype(jnp.float32)
    b_lo = b - b_hi

    def d(x, y):
        return jnp.dot(x, y, preferred_element_type=jnp.float32)

    return d(a_hi, b_hi) + d(a_hi, b_lo) + (d(a_lo, b_hi) + d(a_lo, b_lo))


def _signal_kernel(pitch_ref, pamp_ref, apamp_ref, w_ref, cw_ref, noise_ref,
                   out_ref, phase_ref):
    """One (batch-block, time-tile) step of the signal generator.

    pitch_ref/pamp_ref/apamp_ref : VMEM (1, bB, n_win)  frame windows for this tile
    w_ref  : VMEM (1, n_win, tT)  linear-interp operator (VMEM-resident when shared)
    cw_ref : VMEM (1, n_win, tT)  omega * cumsum_t(interp) operator (prefix sum folded in)
    noise_ref : VMEM (bB, tT)
    out_ref   : VMEM (bB, tT)
    phase_ref : VMEM (bB, 1) scratch -- running phase carry across time tiles
    """
    j = pl.program_id(1)

    @pl.when(j == 0)
    def _():
        phase_ref[...] = jnp.zeros_like(phase_ref)

    w = w_ref[0]    # [n_win, tT]
    cw = cw_ref[0]  # [n_win, tT]

    # Frame -> sample expansion (and, for pitch, the in-tile prefix sum) as small
    # f32-exact matmuls; M = bB rows so the MXU is nearly idle but exact.
    pamp_u = _exact_f32_dot(pamp_ref[0], w)     # [bB, tT]
    apamp_u = _exact_f32_dot(apamp_ref[0], w)   # [bB, tT]
    dphase = _exact_f32_dot(pitch_ref[0], cw)   # [bB, tT] in-tile phase increment

    phase = phase_ref[...] + dphase

    # Carry the running phase to the next tile, wrapped to [0, 2*pi) so the sin
    # argument stays small for f32 accuracy at long T.
    # TODO(synk): a Kahan-compensated carry would further reduce drift for
    # minute-scale audio.
    carry = phase[:, -1:]
    phase_ref[...] = carry - _TWO_PI * jnp.floor(carry * (1.0 / _TWO_PI))

    out_ref[...] = pamp_u * jnp.sin(phase) + apamp_u * noise_ref[...]


def _build_plan(N, scale_factor, T, scale, in_sr, out_sr, target_tile, omega_scale):
    """Host-side plan: time tile, frame windows, and the (cumulative) interp operators.

    torch nn.Upsample(mode='linear', align_corners=False) semantics:
        src = (t + 0.5)/scale_factor - 0.5 (clamped at 0), 2-tap blend of floor/ceil.
    The boundary clamps are absorbed into an edge-padded frame axis so the per-tile
    weight pattern is exactly periodic for rational scale factors, which lets a
    single [n_win, tT] operator stay VMEM-resident across all time tiles.
    """
    # ---- choose the time tile --------------------------------------------------
    p_num = int(round(scale * out_sr))
    q_den = int(in_sr)
    rational_ok = abs(p_num / q_den - scale_factor) < 1e-9
    tT = None
    periodic_candidate = False
    if rational_ok:
        g = math.gcd(p_num, q_den)
        p, q = p_num // g, q_den // g
        base = (p * _LANE) // math.gcd(p, _LANE)  # lcm(p, 128): smallest periodic, lane-dense tile
        if base <= _MAX_SHARED_TILE:
            m = max(1, min(max(target_tile // base, 1), -(-T // base)))
            # keep the resident W + cumW operators bounded (<= ~8 MiB single-buffered,
            # so the v7x 64 MiB / default 32 MiB VMEM budgets are safe).
            while m > 1 and 8 * ((m * base * q) // p + 8) * (m * base) > (8 << 20):
                m -= 1
            tT = m * base
            periodic_candidate = True
    if tT is None:
        # Non-period-aligned scale factor: lane-dense tile, streamed per-tile operator.
        tT = min(_round_up(T, _LANE), _round_up(max(target_tile, _LANE), _LANE))
    G = -(-T // tT)
    T_pad = G * tT

    # ---- per-sample taps / weights (float64) ------------------------------------
    t = np.arange(T_pad, dtype=np.float64)
    src = (t + 0.5) / scale_factor - 0.5          # unclamped; clamps absorbed by edge padding
    i0 = np.floor(src).astype(np.int64)           # >= -1 always; > N-1 only for padded tail t >= T
    lam = src - i0
    i0 = np.minimum(i0, N - 1)
    tap0 = i0 + 1                                  # index into the edge-padded frame axis

    tap0_2d = tap0.reshape(G, tT)
    win_start = tap0_2d.min(axis=1)                # first frame needed by each tile
    span = (tap0_2d.max(axis=1) + 1) - win_start + 1
    n_win = int(_round_up(max(int(span.max()), 1), 8))   # sublane-aligned operator rows

    tile_of = np.repeat(np.arange(G), tT)
    col = np.tile(np.arange(tT), G)
    rel0 = tap0 - win_start[tile_of]

    # ---- can a single operator be shared by every tile? --------------------------
    shared = periodic_candidate
    if shared and G > 1:
        v = np.arange(tT, T)                       # valid samples outside tile 0
        shared = (np.array_equal(rel0[v], rel0[v - tT])
                  and float(np.max(np.abs(lam[v] - lam[v - tT]))) < 1e-9)
    G_op = 1 if shared else G

    # ---- build the interp operator(s) and their cumulative (phase) version -------
    W = np.zeros((G_op, n_win, tT), dtype=np.float64)
    if shared:
        bt = np.arange(tT)
        jj = np.zeros(tT, dtype=np.int64)
    else:
        bt = np.arange(T_pad)
        jj = tile_of
    np.add.at(W, (jj, rel0[bt], col[bt]), 1.0 - lam[bt])
    np.add.at(W, (jj, rel0[bt] + 1, col[bt]), lam[bt])
    cumW = np.cumsum(W, axis=-1) * omega_scale     # fold omega AND the prefix sum in here

    L = max(N + 2, int(win_start.max()) + n_win)   # edge-padded frame-axis length
    return dict(tT=tT, G=G, T_pad=T_pad, n_win=n_win, shared=shared,
                win_start=win_start.astype(np.int64), L=L,
                W=W.astype(np.float32), cumW=cumW.astype(np.float32))


def signal_generator(pitch, p_amp, ap_amp, noise=None, *, scale,
                     input_sample_rate, output_sample_rate,
                     noise_seed=0, tile_t=1024):
    """JAX/Pallas port of SignalGenerator.forward.

    pitch, p_amp, ap_amp: float32 [B, N] frame-level controls.
    noise: optional float32 [B, T]; if None, uniform(-1, 1) noise is generated in the
      wrapper (torch.rand_like equivalent).
    Returns float32 [B, T], T = floor(N * scale * out_sr / in_sr).
    """
    pitch = jnp.asarray(pitch, jnp.float32)
    p_amp = jnp.asarray(p_amp, jnp.float32)
    ap_amp = jnp.asarray(ap_amp, jnp.float32)
    B, N = pitch.shape

    scale_factor = scale * (output_sample_rate / input_sample_rate)
    T = int(math.floor(N * scale_factor))
    omega_scale = _TWO_PI / float(output_sample_rate)

    plan = _build_plan(N, scale_factor, T, scale, input_sample_rate,
                       output_sample_rate, int(tile_t), omega_scale)
    tT, G, T_pad, n_win = plan["tT"], plan["G"], plan["T_pad"], plan["n_win"]

    # Edge-padded frame axis + per-tile frame windows (frame-rate data only; this is
    # cheap layout plumbing, not compute hoisting).
    pad_r = plan["L"] - N - 1
    win_idx = plan["win_start"][:, None] + np.arange(n_win, dtype=np.int64)[None, :]

    def _window(x):
        xp = jnp.pad(x, ((0, 0), (1, pad_r)), mode="edge")
        return jnp.transpose(xp[:, win_idx], (1, 0, 2))            # [G, B, n_win]

    pitch_w, pamp_w, apamp_w = _window(pitch), _window(p_amp), _window(ap_amp)

    if noise is None:
        # torch.rand_like(x) * 2 - 1 equivalent.
        # TODO(synk): an in-kernel pltpu.prng_random_bits path would remove this
        # [B, T] HBM stream, but the TPU hardware PRNG does not lower in
        # interpret/CPU mode, so the portable wrapper RNG is used instead.
        noise = jax.random.uniform(jax.random.PRNGKey(noise_seed), (B, T),
                                   dtype=jnp.float32, minval=-1.0, maxval=1.0)
    noise = jnp.asarray(noise, jnp.float32)
    if T_pad != T:
        noise = jnp.pad(noise, ((0, 0), (0, T_pad - T)))

    w_op = jnp.asarray(plan["W"])       # [G_op, n_win, tT]
    cw_op = jnp.asarray(plan["cumW"])   # [G_op, n_win, tT]

    # Batch blocks: "parallel" leading grid axis so v7x's second TensorCore is used
    # when B >= 16 (phase carry is independent per batch row).
    # TODO(synk): for B < 8, stacking k = 8//B time chunks on the sublane axis would
    # raise VPU occupancy further (short intra-step carry chain) -- not done here.
    bB = 8 if (B % 8 == 0) else B
    NB = B // bB

    if plan["shared"]:
        op_map = lambda bi, j: (0, 0, 0)    # resident operator: DMA'd once, reused by every tile
    else:
        op_map = lambda bi, j: (j, 0, 0)    # fallback: streamed per time tile
    win_map = lambda bi, j: (j, bi, 0)
    sig_map = lambda bi, j: (bi, j)

    out = pl.pallas_call(
        _signal_kernel,
        out_shape=jax.ShapeDtypeStruct((B, T_pad), jnp.float32),
        grid_spec=pltpu.PrefetchScalarGridSpec(
            num_scalar_prefetch=0,
            grid=(NB, G),
            in_specs=[
                pl.BlockSpec((1, bB, n_win), win_map),   # pitch window
                pl.BlockSpec((1, bB, n_win), win_map),   # p_amp window
                pl.BlockSpec((1, bB, n_win), win_map),   # ap_amp window
                pl.BlockSpec((1, n_win, tT), op_map),    # interp operator W
                pl.BlockSpec((1, n_win, tT), op_map),    # cumulative operator omega*cumsum(W)
                pl.BlockSpec((bB, tT), sig_map),         # noise
            ],
            out_specs=pl.BlockSpec((bB, tT), sig_map),
            scratch_shapes=[pltpu.VMEM((bB, 1), jnp.float32)],     # running phase carry
        ),
        compiler_params=pltpu.CompilerParams(
            dimension_semantics=("parallel", "arbitrary"),
            vmem_limit_bytes=48 * 1024 * 1024,
        ),
    )(pitch_w, pamp_w, apamp_w, w_op, cw_op, noise)

    return out[:, :T]


def _reference_f64(pitch, p_amp, ap_amp, noise, scale_factor, output_sample_rate):
    """float64 numpy reference (torch nn.Upsample linear, align_corners=False)."""
    pitch = np.asarray(pitch, np.float64)
    p_amp = np.asarray(p_amp, np.float64)
    ap_amp = np.asarray(ap_amp, np.float64)
    noise = np.asarray(noise, np.float64)
    _, N = pitch.shape
    T = int(math.floor(N * scale_factor))
    t = np.arange(T, dtype=np.float64)
    src = np.maximum((t + 0.5) / scale_factor - 0.5, 0.0)
    i0 = np.minimum(np.floor(src).astype(np.int64), N - 1)
    lam = src - np.floor(src)
    i1 = np.minimum(i0 + 1, N - 1)

    def up(x):
        return x[:, i0] * (1.0 - lam) + x[:, i1] * lam

    phase = np.cumsum(2.0 * np.pi * up(pitch) / output_sample_rate, axis=-1)
    return up(p_amp) * np.sin(phase) + up(ap_amp) * noise


if __name__ == "__main__":
    def _run_case(name, B, N, scale, in_sr, out_sr, key, atol, rtol):
        sf = scale * (out_sr / in_sr)
        T = int(math.floor(N * sf))
        kp, ka, kq, kn = jax.random.split(key, 4)
        pitch = 100.0 + 200.0 * jax.random.uniform(kp, (B, N), dtype=jnp.float32)
        p_amp = jax.random.uniform(ka, (B, N), dtype=jnp.float32)
        ap_amp = 0.1 * jax.random.uniform(kq, (B, N), dtype=jnp.float32)
        noise = jax.random.uniform(kn, (B, T), dtype=jnp.float32,
                                   minval=-1.0, maxval=1.0)
        out = signal_generator(pitch, p_amp, ap_amp, noise, scale=scale,
                               input_sample_rate=in_sr, output_sample_rate=out_sr)
        out = jax.block_until_ready(out)
        assert out.shape == (B, T), (name, out.shape, (B, T))
        ref = _reference_f64(np.asarray(pitch), np.asarray(p_amp),
                             np.asarray(ap_amp), np.asarray(noise), sf, out_sr)
        np.testing.assert_allclose(np.asarray(out), ref.astype(np.float32),
                                   atol=atol, rtol=rtol, err_msg=name)

    root = jax.random.PRNGKey(0)
    k1, k2, k3, k4 = jax.random.split(root, 4)

    # 1) small single-tile case (B=2, N=32 -> T=128), resident-operator path.
    _run_case("single_tile", 2, 32, 4, 16000, 16000, k1, atol=5e-4, rtol=1e-3)
    # 2) multi-tile case exercising the carried phase + shared resident operator.
    _run_case("multi_tile", 2, 640, 4, 16000, 16000, k2, atol=2e-3, rtol=2e-3)
    # 3) non-period-aligned scale factor -> streamed per-tile operator fallback.
    _run_case("fallback", 2, 300, 3, 16000, 22050, k3, atol=2e-3, rtol=2e-3)

    # 4) noise=None path (torch.rand_like equivalent via wrapper RNG).
    B, N, scale, in_sr, out_sr = 2, 32, 4, 16000, 16000
    T = int(math.floor(N * scale * (out_sr / in_sr)))
    kp, ka, kq = jax.random.split(k4, 3)
    pitch = 100.0 + 200.0 * jax.random.uniform(kp, (B, N), dtype=jnp.float32)
    p_amp = jax.random.uniform(ka, (B, N), dtype=jnp.float32)
    ap_amp = 0.1 * jax.random.uniform(kq, (B, N), dtype=jnp.float32)
    out_rand = signal_generator(pitch, p_amp, ap_amp, None, scale=scale,
                                input_sample_rate=in_sr, output_sample_rate=out_sr,
                                noise_seed=123)
    out_rand = jax.block_until_ready(out_rand)
    assert out_rand.shape == (B, T)
    assert bool(jnp.all(jnp.isfinite(out_rand)))

    print("KERNEL_OK")
</pallas_src>

<mosaic_0001>
module attributes {stable_mosaic.version = 11 : i64} {
  func.func @_signal_kernel(%arg0: i32, %arg1: i32, %arg2: memref<1x2x40xf32, #tpu.memory_space<vmem>>, %arg3: memref<1x2x40xf32, #tpu.memory_space<vmem>>, %arg4: memref<1x2x40xf32, #tpu.memory_space<vmem>>, %arg5: memref<1x40x128xf32, #tpu.memory_space<vmem>>, %arg6: memref<1x40x128xf32, #tpu.memory_space<vmem>>, %arg7: memref<2x128xf32, #tpu.memory_space<vmem>>, %arg8: memref<2x128xf32, #tpu.memory_space<vmem>>, %arg9: memref<2x1xf32, #tpu.memory_space<vmem>>) attributes {dimension_semantics = [#tpu.dimension_semantics<parallel>, #tpu.dimension_semantics<arbitrary>], iteration_bounds = array<i64: 1, 1>, scalar_prefetch = 0 : i64, scratch_operands = 1 : i64, tpu.core_type = #tpu.core_type<tc>, window_params = [{transform_indices = @transform_0, window_bounds = array<i64: 1, 2, 40>}, {transform_indices = @transform_1, window_bounds = array<i64: 1, 2, 40>}, {transform_indices = @transform_2, window_bounds = array<i64: 1, 2, 40>}, {pipeline_mode = #tpu.pipeline_mode<synchronous>, transform_indices = @transform_3, window_bounds = array<i64: 1, 40, 128>}, {pipeline_mode = #tpu.pipeline_mode<synchronous>, transform_indices = @transform_4, window_bounds = array<i64: 1, 40, 128>}, {transform_indices = @transform_5, window_bounds = array<i64: 2, 128>}, {transform_indices = @transform_6, window_bounds = array<i64: 2, 128>}]} {
    %c0_i32 = arith.constant 0 : i32
    %0 = arith.cmpi eq, %arg1, %c0_i32 : i32
    %1 = arith.extui %0 : i1 to i32
    %c0_i32_0 = arith.constant 0 : i32
    %2 = arith.cmpi ne, %1, %c0_i32_0 : i32
    scf.if %2 {
      %cst_36 = arith.constant 0.000000e+00 : f32
      %69 = vector.broadcast %cst_36 : f32 to vector<2x1xf32>
      %c0_37 = arith.constant 0 : index
      %c0_38 = arith.constant 0 : index
      %70 = vector.load %arg9[%c0_37, %c0_38] : memref<2x1xf32, #tpu.memory_space<vmem>>, vector<2x1xf32>
      tpu.vector_store %arg9[%c0_37, %c0_38], %69 {strides = array<i32>} : memref<2x1xf32, #tpu.memory_space<vmem>>, vector<2x1xf32>,
    } else {
    }
    %c0 = arith.constant 0 : index
    %c0_1 = arith.constant 0 : index
    %c0_2 = arith.constant 0 : index
    %3 = vector.load %arg5[%c0, %c0_1, %c0_2] : memref<1x40x128xf32, #tpu.memory_space<vmem>>, vector<1x40x128xf32>
    %4 = vector.shape_cast %3 : vector<1x40x128xf32> to vector<40x128xf32>
    %c0_3 = arith.constant 0 : index
    %c0_4 = arith.constant 0 : index
    %c0_5 = arith.constant 0 : index
    %5 = vector.load %arg6[%c0_3, %c0_4, %c0_5] : memref<1x40x128xf32, #tpu.memory_space<vmem>>, vector<1x40x128xf32>
    %6 = vector.shape_cast %5 : vector<1x40x128xf32> to vector<40x128xf32>
    %c0_6 = arith.constant 0 : index
    %c0_7 = arith.constant 0 : index
    %c0_8 = arith.constant 0 : index
    %7 = vector.load %arg3[%c0_6, %c0_7, %c0_8] : memref<1x2x40xf32, #tpu.memory_space<vmem>>, vector<1x2x40xf32>
    %8 = vector.shape_cast %7 : vector<1x2x40xf32> to vector<2x40xf32>
    %9 = arith.truncf %8 : vector<2x40xf32> to vector<2x40xbf16>
    %10 = arith.extf %9 : vector<2x40xbf16> to vector<2x40xf32>
    %11 = arith.subf %8, %10 : vector<2x40xf32>
    %12 = arith.truncf %4 : vector<40x128xf32> to vector<40x128xbf16>
    %13 = arith.extf %12 : vector<40x128xbf16> to vector<40x128xf32>
    %14 = arith.subf %4, %13 : vector<40x128xf32>
    %cst = arith.constant dense<0.000000e+00> : vector<2x128xf32>
    %15 = tpu.matmul %10, %13, %cst {dimension_numbers = #tpu.dot_dimension_numbers<[1], [0], [0], [1], [0, 0, 1, 1], [], []>} : vector<2x40xf32>, vector<40x128xf32>, vector<2x128xf32> -> vector<2x128xf32>
    %cst_9 = arith.constant dense<0.000000e+00> : vector<2x128xf32>
    %16 = tpu.matmul %10, %14, %cst_9 {dimension_numbers = #tpu.dot_dimension_numbers<[1], [0], [0], [1], [0, 0, 1, 1], [], []>} : vector<2x40xf32>, vector<40x128xf32>, vector<2x128xf32> -> vector<2x128xf32>
    %17 = arith.addf %15, %16 : vector<2x128xf32>
    %cst_10 = arith.constant dense<0.000000e+00> : vector<2x128xf32>
    %18 = tpu.matmul %11, %13, %cst_10 {dimension_numbers = #tpu.dot_dimension_numbers<[1], [0], [0], [1], [0, 0, 1, 1], [], []>} : vector<2x40xf32>, vector<40x128xf32>, vector<2x128xf32> -> vector<2x128xf32>
    %cst_11 = arith.constant dense<0.000000e+00> : vector<2x128xf32>
    %19 = tpu.matmul %11, %14, %cst_11 {dimension_numbers = #tpu.dot_dimension_numbers<[1], [0], [0], [1], [0, 0, 1, 1], [], []>} : vector<2x40xf32>, vector<40x128xf32>, vector<2x128xf32> -> vector<2x128xf32>
    %20 = arith.addf %18, %19 : vector<2x128xf32>
    %21 = arith.addf %17, %20 : vector<2x128xf32>
    %c0_12 = arith.constant 0 : index
    %c0_13 = arith.constant 0 : index
    %c0_14 = arith.constant 0 : index
    %22 = vector.load %arg4[%c0_12, %c0_13, %c0_14] : memref<1x2x40xf32, #tpu.memory_space<vmem>>, vector<1x2x40xf32>
    %23 = vector.shape_cast %22 : vector<1x2x40xf32> to vector<2x40xf32>
    %24 = arith.truncf %23 : vector<2x40xf32> to vector<2x40xbf16>
    %25 = arith.extf %24 : vector<2x40xbf16> to vector<2x40xf32>
    %26 = arith.subf %23, %25 : vector<2x40xf32>
    %27 = arith.truncf %4 : vector<40x128xf32> to vector<40x128xbf16>
    %28 = arith.extf %27 : vector<40x128xbf16> to vector<40x128xf32>
    %29 = arith.subf %4, %28 : vector<40x128xf32>
    %cst_15 = arith.constant dense<0.000000e+00> : vector<2x128xf32>
    %30 = tpu.matmul %25, %28, %cst_15 {dimension_numbers = #tpu.dot_dimension_numbers<[1], [0], [0], [1], [0, 0, 1, 1], [], []>} : vector<2x40xf32>, vector<40x128xf32>, vector<2x128xf32> -> vector<2x128xf32>
    %cst_16 = arith.constant dense<0.000000e+00> : vector<2x128xf32>
    %31 = tpu.matmul %25, %29, %cst_16 {dimension_numbers = #tpu.dot_dimension_numbers<[1], [0], [0], [1], [0, 0, 1, 1], [], []>} : vector<2x40xf32>, vector<40x128xf32>, vector<2x128xf32> -> vector<2x128xf32>
    %32 = arith.addf %30, %31 : vector<2x128xf32>
    %cst_17 = arith.constant dense<0.000000e+00> : vector<2x128xf32>
    %33 = tpu.matmul %26, %28, %cst_17 {dimension_numbers = #tpu.dot_dimension_numbers<[1], [0], [0], [1], [0, 0, 1, 1], [], []>} : vector<2x40xf32>, vector<40x128xf32>, vector<2x128xf32> -> vector<2x128xf32>
    %cst_18 = arith.constant dense<0.000000e+00> : vector<2x128xf32>
    %34 = tpu.matmul %26, %29, %cst_18 {dimension_numbers = #tpu.dot_dimension_numbers<[1], [0], [0], [1], [0, 0, 1, 1], [], []>} : vector<2x40xf32>, vector<40x128xf32>, vector<2x128xf32> -> vector<2x128xf32>
    %35 = arith.addf %33, %34 : vector<2x128xf32>
    %36 = arith.addf %32, %35 : vector<2x128xf32>
    %c0_19 = arith.constant 0 : index
    %c0_20 = arith.constant 0 : index
    %c0_21 = arith.constant 0 : index
    %37 = vector.load %arg2[%c0_19, %c0_20, %c0_21] : memref<1x2x40xf32, #tpu.memory_space<vmem>>, vector<1x2x40xf32>
    %38 = vector.shape_cast %37 : vector<1x2x40xf32> to vector<2x40xf32>
    %39 = arith.truncf %38 : vector<2x40xf32> to vector<2x40xbf16>
    %40 = arith.extf %39 : vector<2x40xbf16> to vector<2x40xf32>
    %41 = arith.subf %38, %40 : vector<2x40xf32>
    %42 = arith.truncf %6 : vector<40x128xf32> to vector<40x128xbf16>
    %43 = arith.extf %42 : vector<40x128xbf16> to vector<40x128xf32>
    %44 = arith.subf %6, %43 : vector<40x128xf32>
    %cst_22 = arith.constant dense<0.000000e+00> : vector<2x128xf32>
    %45 = tpu.matmul %40, %43, %cst_22 {dimension_numbers = #tpu.dot_dimension_numbers<[1], [0], [0], [1], [0, 0, 1, 1], [], []>} : vector<2x40xf32>, vector<40x128xf32>, vector<2x128xf32> -> vector<2x128xf32>
    %cst_23 = arith.constant dense<0.000000e+00> : vector<2x128xf32>
    %46 = tpu.matmul %40, %44, %cst_23 {dimension_numbers = #tpu.dot_dimension_numbers<[1], [0], [0], [1], [0, 0, 1, 1], [], []>} : vector<2x40xf32>, vector<40x128xf32>, vector<2x128xf32> -> vector<2x128xf32>
    %47 = arith.addf %45, %46 : vector<2x128xf32>
    %cst_24 = arith.constant dense<0.000000e+00> : vector<2x128xf32>
    %48 = tpu.matmul %41, %43, %cst_24 {dimension_numbers = #tpu.dot_dimension_numbers<[1], [0], [0], [1], [0, 0, 1, 1], [], []>} : vector<2x40xf32>, vector<40x128xf32>, vector<2x128xf32> -> vector<2x128xf32>
    %cst_25 = arith.constant dense<0.000000e+00> : vector<2x128xf32>
    %49 = tpu.matmul %41, %44, %cst_25 {dimension_numbers = #tpu.dot_dimension_numbers<[1], [0], [0], [1], [0, 0, 1, 1], [], []>} : vector<2x40xf32>, vector<40x128xf32>, vector<2x128xf32> -> vector<2x128xf32>
    %50 = arith.addf %48, %49 : vector<2x128xf32>
    %51 = arith.addf %47, %50 : vector<2x128xf32>
    %c0_26 = arith.constant 0 : index
    %c0_27 = arith.constant 0 : index
    %52 = vector.load %arg9[%c0_26, %c0_27] : memref<2x1xf32, #tpu.memory_space<vmem>>, vector<2x1xf32>
    %53 = vector.broadcast %52 : vector<2x1xf32> to vector<2x128xf32>
    %54 = arith.addf %53, %51 : vector<2x128xf32>
    %55 = vector.extract_strided_slice %54 {offsets = [0, 127], sizes = [2, 1], strides = [1, 1]} : vector<2x128xf32> to vector<2x1xf32>
    %cst_28 = arith.constant 0.159154937 : f32
    %56 = vector.broadcast %cst_28 : f32 to vector<2x1xf32>
    %57 = arith.mulf %55, %56 : vector<2x1xf32>
    %58 = math.floor %57 : vector<2x1xf32>
    %cst_29 = arith.constant 6.28318548 : f32
    %59 = vector.broadcast %cst_29 : f32 to vector<2x1xf32>
    %60 = arith.mulf %59, %58 : vector<2x1xf32>
    %61 = arith.subf %55, %60 : vector<2x1xf32>
    %c0_30 = arith.constant 0 : index
    %c0_31 = arith.constant 0 : index
    %62 = vector.load %arg9[%c0_30, %c0_31] : memref<2x1xf32, #tpu.memory_space<vmem>>, vector<2x1xf32>
    tpu.vector_store %arg9[%c0_30, %c0_31], %61 {strides = array<i32>} : memref<2x1xf32, #tpu.memory_space<vmem>>, vector<2x1xf32>,
    %63 = math.sin %54 : vector<2x128xf32>
    %64 = arith.mulf %21, %63 : vector<2x128xf32>
    %c0_32 = arith.constant 0 : index
    %c0_33 = arith.constant 0 : index
    %65 = vector.load %arg7[%c0_32, %c0_33] : memref<2x128xf32, #tpu.memory_space<vmem>>, vector<2x128xf32>
    %66 = arith.mulf %36, %65 : vector<2x128xf32>
    %67 = arith.addf %64, %66 : vector<2x128xf32>
    %c0_34 = arith.constant 0 : index
    %c0_35 = arith.constant 0 : index
    %68 = vector.load %arg8[%c0_34, %c0_35] : memref<2x128xf32, #tpu.memory_space<vmem>>, vector<2x128xf32>
    tpu.vector_store %arg8[%c0_34, %c0_35], %67 {strides = array<i32>} : memref<2x128xf32, #tpu.memory_space<vmem>>, vector<2x128xf32>,
    return
  }
  func.func @transform_0(%arg0: i32, %arg1: i32) -> (i32, i32, i32) {
    %c0_i32 = arith.constant 0 : i32
    %c0_i32_0 = arith.constant 0 : i32
    return %arg1, %arg0, %c0_i32 : i32, i32, i32
  }
  func.func @transform_1(%arg0: i32, %arg1: i32) -> (i32, i32, i32) {
    %c0_i32 = arith.constant 0 : i32
    %c0_i32_0 = arith.constant 0 : i32
    return %arg1, %arg0, %c0_i32 : i32, i32, i32
  }
  func.func @transform_2(%arg0: i32, %arg1: i32) -> (i32, i32, i32) {
    %c0_i32 = arith.constant 0 : i32
    %c0_i32_0 = arith.constant 0 : i32
    return %arg1, %arg0, %c0_i32 : i32, i32, i32
  }
  func.func @transform_3(%arg0: i32, %arg1: i32) -> (i32, i32, i32) {
    %c0_i32 = arith.constant 0 : i32
    %c0_i32_0 = arith.constant 0 : i32
    %c0_i32_1 = arith.constant 0 : i32
    %c0_i32_2 = arith.constant 0 : i32
    return %c0_i32, %c0_i32_0, %c0_i32_1 : i32, i32, i32
  }
  func.func @transform_4(%arg0: i32, %arg1: i32) -> (i32, i32, i32) {
    %c0_i32 = arith.constant 0 : i32
    %c0_i32_0 = arith.constant 0 : i32
    %c0_i32_1 = arith.constant 0 : i32
    %c0_i32_2 = arith.constant 0 : i32
    return %c0_i32, %c0_i32_0, %c0_i32_1 : i32, i32, i32
  }
  func.func @transform_5(%arg0: i32, %arg1: i32) -> (i32, i32) {
    %c0_i32 = arith.constant 0 : i32
    return %arg0, %arg1 : i32, i32
  }
  func.func @transform_6(%arg0: i32, %arg1: i32) -> (i32, i32) {
    %c0_i32 = arith.constant 0 : i32
    return %arg0, %arg1 : i32, i32
  }
}

</mosaic_0001>

<llo_original>
// kernel: tpu_custom_call.1
$region0: #{tpu_custom_call.1}
  #allocation0 [shape = 'u32[]', space=smem, size = 0x4, offset = 0x4, fixed_abs, tag = 'smem constant byte address 0x4 - core index']
  #allocation1 [shape = 'u32[144,128]{1,0:T(1,128)}', space=vmem, size = 0x12000, scoped, tag = 'internal scratch']
  #allocation2 [shape = 'f32[2,1]{1,0:T(2,128)}', space=vmem, size = 0x400, scoped, tag = 'scratch operand']
  %s0 = inlined_call_operand.hbm [shape: f32[1,2,40], index: 0, kind: input, shape index: {}]
  %s1 = inlined_call_operand.hbm [shape: f32[1,2,40], index: 1, kind: input, shape index: {}]
  %s2 = inlined_call_operand.vmem [shape: f32[1,2,40], index: 2, kind: input, shape index: {}]
  %s3 = inlined_call_operand.hbm [shape: f32[1,40,128], index: 3, kind: input, shape index: {}]
  %s4 = inlined_call_operand.hbm [shape: f32[1,40,128], index: 4, kind: input, shape index: {}]
  %s5 = inlined_call_operand.vmem [shape: f32[2,128], index: 5, kind: input, shape index: {}]
  %s6 = inlined_call_operand.hbm [shape: f32[2,128], index: 6, kind: output, shape index: {}]
  %s7 = sld [smem:[#allocation0]]
  $region54: #{tpu_custom_call.1} parent=0
    _
  %s9 = ssub.s32 1, %s7
  %s10 = scalar_select 0, %s9, %s7
  $region1: #{tpu_custom_call.1} parent=0
    #allocation3 [shape = 'u8[1024]{0}', space=vmem, size = 0x400, scoped, tag = 'input window, operand 0, single buffered']
    #allocation4 [shape = 's32[1]{0}', space=sflag, size = 0x4, scoped, tag = 'scoped memory for tpu_custom_call.1']
    #allocation5 [shape = 's32[1]{0}', space=sflag, size = 0x4, scoped, tag = 'scoped memory for tpu_custom_call.1']
    #allocation6 [shape = 'u8[1024]{0}', space=vmem, size = 0x400, scoped, tag = 'input window, operand 1, single buffered']
    #allocation7 [shape = 's32[1]{0}', space=sflag, size = 0x4, scoped, tag = 'scoped memory for tpu_custom_call.1']
    #allocation8 [shape = 'u8[20480]{0}', space=vmem, size = 0x5000, scoped, tag = 'input window, operand 3, single buffered']
    #allocation9 [shape = 'u8[20480]{0}', space=vmem, size = 0x5000, scoped, tag = 'input window, operand 4, single buffered']
    #allocation10 [shape = 's32[1]{0}', space=sflag, size = 0x4, scoped, tag = 'scoped memory for tpu_custom_call.1']
    #allocation11 [shape = 'u8[1024]{0}', space=vmem, size = 0x400, scoped, tag = 'output window, operand 0, single buffered']
    %11 = vsyncpa [#allocation4], 0
    %12 = vsyncpa [#allocation7], 0
    %13 = vsyncpa [#allocation10], 0
    %14 = vsyncpa [#allocation5], 0
    // Predicated region
    $region2: #{tpu_custom_call.1} parent=1 // pred_check
      _
    $region3: #{tpu_custom_call.1} parent=1 // pred_check_branch
      %16 = sbr.rel (0) target = $region5
    $region4: #{tpu_custom_call.1} parent=1 // pred_region
      %s18 = ssub.s32 32, 32
      %19 = vsyncadd [#allocation4], %s18
      %s21 = sshll.u32 [#allocation3], 4
      %s22 = int_to_ptr.vmem [resolvable:$true] %s21
      %24 = dma.hbm_to_vmem [thread:$0]  %s0, 32, %s22, [#allocation4]
    $region5: #{tpu_custom_call.1} parent=1 // pred_fallthru
      _
    // Predicated region
    $region6: #{tpu_custom_call.1} parent=1 // pred_check
      _
    $region7: #{tpu_custom_call.1} parent=1 // pred_check_branch
      %26 = sbr.rel (0) target = $region9
    $region8: #{tpu_custom_call.1} parent=1 // pred_region
      %s28 = ssub.s32 32, 32
      %29 = vsyncadd [#allocation7], %s28
      %s31 = sshll.u32 [#allocation6], 4
      %s32 = int_to_ptr.vmem [resolvable:$true] %s31
      %34 = dma.hbm_to_vmem [thread:$0]  %s1, 32, %s32, [#allocation7]
    $region9: #{tpu_custom_call.1} parent=1 // pred_fallthru
      _
    // Predicated region
    $region10: #{tpu_custom_call.1} parent=1 // pred_check
      _
    $region11: #{tpu_custom_call.1} parent=1 // pred_check_branch
      %36 = sbr.rel (0) target = $region13
    $region12: #{tpu_custom_call.1} parent=1 // pred_region
      _
    $region13: #{tpu_custom_call.1} parent=1 // pred_fallthru
      _
    // Predicated region
    $region14: #{tpu_custom_call.1} parent=1 // pred_check
      _
    $region15: #{tpu_custom_call.1} parent=1 // pred_check_branch
      %38 = sbr.rel (0) target = $region17
    $region16: #{tpu_custom_call.1} parent=1 // pred_region
      %s40 = ssub.s32 640, 640
      %41 = vsyncadd [#allocation7], %s40
      %s42 = sshll.u32 [#allocation8], 4
      %s43 = int_to_ptr.vmem [resolvable:$true] %s42
      %48 = dma.hbm_to_vmem [thread:$0]  %s3, 640, %s43, [#allocation7], 128, 128, 8
    $region17: #{tpu_custom_call.1} parent=1 // pred_fallthru
      _
    // Predicated region
    $region18: #{tpu_custom_call.1} parent=1 // pred_check
      _
    $region19: #{tpu_custom_call.1} parent=1 // pred_check_branch
      %50 = sbr.rel (0) target = $region21
    $region20: #{tpu_custom_call.1} parent=1 // pred_region
      %s52 = ssub.s32 640, 640
      %53 = vsyncadd [#allocation10], %s52
      %s54 = sshll.u32 [#allocation9], 4
      %s55 = int_to_ptr.vmem [resolvable:$true] %s54
      %60 = dma.hbm_to_vmem [thread:$0]  %s4, 640, %s55, [#allocation10], 128, 128, 8
    $region21: #{tpu_custom_call.1} parent=1 // pred_fallthru
      _
    // Predicated region
    $region22: #{tpu_custom_call.1} parent=1 // pred_check
      _
    $region23: #{tpu_custom_call.1} parent=1 // pred_check_branch
      %62 = sbr.rel (0) target = $region25
    $region24: #{tpu_custom_call.1} parent=1 // pred_region
      _
    $region25: #{tpu_custom_call.1} parent=1 // pred_fallthru
      _
    // Predicated region
    $region26: #{tpu_custom_call.1} parent=1 // pred_check
      _
    $region27: #{tpu_custom_call.1} parent=1 // pred_check_branch
      %64 = sbr.rel (0) target = $region29
    $region28: #{tpu_custom_call.1} parent=1 // pred_region
      %65 = dma.done [#allocation4], 32
    $region29: #{tpu_custom_call.1} parent=1 // pred_fallthru
      _
    // Predicated region
    $region30: #{tpu_custom_call.1} parent=1 // pred_check
      _
    $region31: #{tpu_custom_call.1} parent=1 // pred_check_branch
      %67 = sbr.rel (0) target = $region33
    $region32: #{tpu_custom_call.1} parent=1 // pred_region
      %68 = dma.done [#allocation7], 32
    $region33: #{tpu_custom_call.1} parent=1 // pred_fallthru
      _
    // Predicated region
    $region34: #{tpu_custom_call.1} parent=1 // pred_check
      _
    $region35: #{tpu_custom_call.1} parent=1 // pred_check_branch
      %70 = sbr.rel (0) target = $region37
    $region36: #{tpu_custom_call.1} parent=1 // pred_region
      %71 = dma.done [#allocation7], 640
    $region37: #{tpu_custom_call.1} parent=1 // pred_fallthru
      _
    // Predicated region
    $region38: #{tpu_custom_call.1} parent=1 // pred_check
      _
    $region39: #{tpu_custom_call.1} parent=1 // pred_check_branch
      %73 = sbr.rel (0) target = $region41
    $region40: #{tpu_custom_call.1} parent=1 // pred_region
      %74 = dma.done [#allocation10], 640
    $region41: #{tpu_custom_call.1} parent=1 // pred_fallthru
      _
    %p75 = scmp.eq.s32.totalorder 0, 0
    // Predicated region
    $region42: #{tpu_custom_call.1} parent=1 // pred_check
      %p76 = pneg %p75
    $region43: #{tpu_custom_call.1} parent=1 // pred_check_branch
      %78 = sbr.rel (%p76) target = $region45
    $region44: #{tpu_custom_call.1} parent=1 // pred_region
      %vm79 = vcmask 1024
      %80 = vst.msk [vmem:[#allocation2] sm:$0x3] %vm79, 0.0
    $region45: #{tpu_custom_call.1} parent=1 // pred_fallthru
      _
    %v81 = vld [vmem:[#allocation8] sm:$0xff]
    %v82 = vld [vmem:[#allocation8 + $0x8] sm:$0xff]
    %v83 = vld [vmem:[#allocation8 + $0x10] sm:$0xff]
    %v84 = vld [vmem:[#allocation8 + $0x18] sm:$0xff]
    %v85 = vld [vmem:[#allocation8 + $0x20] sm:$0xff]
    %v86 = vld [vmem:[#allocation9] sm:$0xff]
    %v87 = vld [vmem:[#allocation9 + $0x8] sm:$0xff]
    %v88 = vld [vmem:[#allocation9 + $0x10] sm:$0xff]
    %v89 = vld [vmem:[#allocation9 + $0x18] sm:$0xff]
    %v90 = vld [vmem:[#allocation9 + $0x20] sm:$0xff]
    %v91 = vld [vmem:[#allocation6] sm:$0x3]
    %v92 = vpack.c.bf16 %v91, %v91
    %v93 = vunpack.c.l.bf16 %v92
    %v94 = vsub.f32 %v91, %v93
    %v95 = vpack.c.bf16 %v82, %v81
    %v96 = vpack.c.bf16 %v84, %v83
    %v97 = vpack.c.bf16 %v85, %v85
    %v98 = vunpack.c.l.bf16 %v95
    %v99 = vunpack.c.h.bf16 %v95
    %v100 = vunpack.c.l.bf16 %v96
    %v101 = vunpack.c.h.bf16 %v96
    %v102 = vunpack.c.l.bf16 %v97
    %v103 = vsub.f32 %v81, %v98
    %v104 = vsub.f32 %v82, %v99
    %v105 = vsub.f32 %v83, %v100
    %v106 = vsub.f32 %v84, %v101
    %v107 = vsub.f32 %v85, %v102
    %vm108 = vcmask 326656
    %v110 = vsel %vm108, %v93, 0
    %112 = vmatprep.subr.mxu0 0.0
    %113 = vmatpush1.msra.mxu0 0.0
    %114 = vmatprep.subr.mxu0 0.0
    %115 = vmatpush1.msra.mxu0 0.0
    %116 = vmatprep.subr.mxu0 0.0
    %117 = vmatpush1.msra.mxu0 0.0
    %118 = vmatprep.subr.mxu0 0.0
    %119 = vmatpush1.msra.mxu0 0.0
    %120 = vmatprep.subr.mxu0 0.0
    %121 = vmatpush1.msra.mxu0 0.0
    %122 = vmatprep.subr.mxu0 0.0
    %123 = vmatpush1.msra.mxu0 0.0
    %124 = vmatprep.subr.mxu0 0.0
    %125 = vmatpush1.msra.mxu0 0.0
    %126 = vmatprep.subr.mxu0 0.0
    %127 = vmatpush1.msra.mxu0 0.0
    %128 = vmatprep.subr.mxu0 0.0
    %129 = vmatpush1.msra.mxu0 0.0
    %130 = vmatprep.subr.mxu0 0.0
    %131 = vmatpush1.msra.mxu0 0.0
    %132 = vmatprep.subr.mxu0 0.0
    %133 = vmatpush1.msra.mxu0 0.0
    %134 = vmatprep.subr.mxu0 0.0
    %135 = vmatpush1.msra.mxu0 %v107
    %136 = vmatprep.subr.mxu0 0.0
    %137 = vmatpush1.msra.mxu0 %v106
    %138 = vmatprep.subr.mxu0 0.0
    %139 = vmatpush1.msra.mxu0 %v105
    %140 = vmatprep.subr.mxu0 0.0
    %141 = vmatpush1.msra.mxu0 %v104
    %142 = vmatprep.subr.mxu0 0.0
    %143 = vmatpush1.msra.mxu0 %v103
    %144 = vmatprep.subr.mxu0 0.0
    %145 = vmatpush2.msra.mxu0 0.0
    %146 = vmatprep.subr.mxu0 0.0
    %147 = vmatpush2.msra.mxu0 0.0
    %148 = vmatprep.subr.mxu0 0.0
    %149 = vmatpush2.msra.mxu0 0.0
    %150 = vmatprep.subr.mxu0 0.0
    %151 = vmatpush2.msra.mxu0 0.0
    %152 = vmatprep.subr.mxu0 0.0
    %153 = vmatpush2.msra.mxu0 0.0
    %154 = vmatprep.subr.mxu0 0.0
    %155 = vmatpush2.msra.mxu0 0.0
    %156 = vmatprep.subr.mxu0 0.0
    %157 = vmatpush2.msra.mxu0 0.0
    %158 = vmatprep.subr.mxu0 0.0
    %159 = vmatpush2.msra.mxu0 0.0
    %160 = vmatprep.subr.mxu0 0.0
    %161 = vmatpush2.msra.mxu0 0.0
    %162 = vmatprep.subr.mxu0 0.0
    %163 = vmatpush2.msra.mxu0 0.0
    %164 = vmatprep.subr.mxu0 0.0
    %165 = vmatpush2.msra.mxu0 0.0
    %166 = vmatprep.subr.mxu0 0.0
    %167 = vmatpush2.msra.mxu0 0.0
    %168 = vmatprep.subr.mxu0 0.0
    %169 = vmatpush2.msra.mxu0 0.0
    %170 = vmatprep.subr.mxu0 0.0
    %171 = vmatpush2.msra.mxu0 0.0
    %172 = vmatprep.subr.mxu0 0.0
    %173 = vmatpush2.msra.mxu0 0.0
    %174 = vmatprep.subr.mxu0 0.0
    %175 = vmatpush2.msra.mxu0 0.0
    %176 = vmatprep.mubr.f32.mxu0 0.0
    %177 = vmatmul.mubr.f32.gmra.mxu0 %v110
    %v178 = vpop.f32.mrf.mxu0
    %v179 = vadd.f32 0.0, %v178
    %v180 = vpop.f32.mrf.mxu0
    %181 = vdwg.mxu0
    %182 = vmatprep.subr.mxu0 0.0
    %183 = vmatpush1.msra.mxu0 0.0
    %184 = vmatprep.subr.mxu0 0.0
    %185 = vmatpush1.msra.mxu0 0.0
    %186 = vmatprep.subr.mxu0 0.0
    %187 = vmatpush1.msra.mxu0 0.0
    %188 = vmatprep.subr.mxu0 0.0
    %189 = vmatpush1.msra.mxu0 0.0
    %190 = vmatprep.subr.mxu0 0.0
    %191 = vmatpush1.msra.mxu0 0.0
    %192 = vmatprep.subr.mxu0 0.0
    %193 = vmatpush1.msra.mxu0 0.0
    %194 = vmatprep.subr.mxu0 0.0
    %195 = vmatpush1.msra.mxu0 0.0
    %196 = vmatprep.subr.mxu0 0.0
    %197 = vmatpush1.msra.mxu0 0.0
    %198 = vmatprep.subr.mxu0 0.0
    %199 = vmatpush1.msra.mxu0 0.0
    %200 = vmatprep.subr.mxu0 0.0
    %201 = vmatpush1.msra.mxu0 0.0
    %202 = vmatprep.subr.mxu0 0.0
    %203 = vmatpush1.msra.mxu0 0.0
    %204 = vmatprep.subr.mxu0 0.0
    %205 = vmatpush1.msra.mxu0 %v102
    %206 = vmatprep.subr.mxu0 0.0
    %207 = vmatpush1.msra.mxu0 %v101
    %208 = vmatprep.subr.mxu0 0.0
    %209 = vmatpush1.msra.mxu0 %v100
    %210 = vmatprep.subr.mxu0 0.0
    %211 = vmatpush1.msra.mxu0 %v99
    %212 = vmatprep.subr.mxu0 0.0
    %213 = vmatpush1.msra.mxu0 %v98
    %214 = vmatprep.subr.mxu0 0.0
    %215 = vmatpush2.msra.mxu0 0.0
    %216 = vmatprep.subr.mxu0 0.0
    %217 = vmatpush2.msra.mxu0 0.0
    %218 = vmatprep.subr.mxu0 0.0
    %219 = vmatpush2.msra.mxu0 0.0
    %220 = vmatprep.subr.mxu0 0.0
    %221 = vmatpush2.msra.mxu0 0.0
    %222 = vmatprep.subr.mxu0 0.0
    %223 = vmatpush2.msra.mxu0 0.0
    %224 = vmatprep.subr.mxu0 0.0
    %225 = vmatpush2.msra.mxu0 0.0
    %226 = vmatprep.subr.mxu0 0.0
    %227 = vmatpush2.msra.mxu0 0.0
    %228 = vmatprep.subr.mxu0 0.0
    %229 = vmatpush2.msra.mxu0 0.0
    %230 = vmatprep.subr.mxu0 0.0
    %231 = vmatpush2.msra.mxu0 0.0
    %232 = vmatprep.subr.mxu0 0.0
    %233 = vmatpush2.msra.mxu0 0.0
    %234 = vmatprep.subr.mxu0 0.0
    %235 = vmatpush2.msra.mxu0 0.0
    %236 = vmatprep.subr.mxu0 0.0
    %237 = vmatpush2.msra.mxu0 0.0
    %238 = vmatprep.subr.mxu0 0.0
    %239 = vmatpush2.msra.mxu0 0.0
    %240 = vmatprep.subr.mxu0 0.0
    %241 = vmatpush2.msra.mxu0 0.0
    %242 = vmatprep.subr.mxu0 0.0
    %243 = vmatpush2.msra.mxu0 0.0
    %244 = vmatprep.subr.mxu0 0.0
    %245 = vmatpush2.msra.mxu0 0.0
    %246 = vmatprep.mubr.f32.mxu0 0.0
    %247 = vmatmul.mubr.f32.gmra.mxu0 %v110
    %v248 = vpop.f32.mrf.mxu0
    %v249 = vadd.f32 %v179, %v248
    %v250 = vpop.f32.mrf.mxu0
    %251 = vdwg.mxu0
    %v253 = vsel %vm108, %v94, 0
    %255 = vmatprep.subr.mxu0 0.0
    %256 = vmatpush1.msra.mxu0 0.0
    %257 = vmatprep.subr.mxu0 0.0
    %258 = vmatpush1.msra.mxu0 0.0
    %259 = vmatprep.subr.mxu0 0.0
    %260 = vmatpush1.msra.mxu0 0.0
    %261 = vmatprep.subr.mxu0 0.0
    %262 = vmatpush1.msra.mxu0 0.0
    %263 = vmatprep.subr.mxu0 0.0
    %264 = vmatpush1.msra.mxu0 0.0
    %265 = vmatprep.subr.mxu0 0.0
    %266 = vmatpush1.msra.mxu0 0.0
    %267 = vmatprep.subr.mxu0 0.0
    %268 = vmatpush1.msra.mxu0 0.0
    %269 = vmatprep.subr.mxu0 0.0
    %270 = vmatpush1.msra.mxu0 0.0
    %271 = vmatprep.subr.mxu0 0.0
    %272 = vmatpush1.msra.mxu0 0.0
    %273 = vmatprep.subr.mxu0 0.0
    %274 = vmatpush1.msra.mxu0 0.0
    %275 = vmatprep.subr.mxu0 0.0
    %276 = vmatpush1.msra.mxu0 0.0
    %277 = vmatprep.subr.mxu0 0.0
    %278 = vmatpush1.msra.mxu0 %v107
    %279 = vmatprep.subr.mxu0 0.0
    %280 = vmatpush1.msra.mxu0 %v106
    %281 = vmatprep.subr.mxu0 0.0
    %282 = vmatpush1.msra.mxu0 %v105
    %283 = vmatprep.subr.mxu0 0.0
    %284 = vmatpush1.msra.mxu0 %v104
    %285 = vmatprep.subr.mxu0 0.0
    %286 = vmatpush1.msra.mxu0 %v103
    %287 = vmatprep.subr.mxu0 0.0
    %288 = vmatpush2.msra.mxu0 0.0
    %289 = vmatprep.subr.mxu0 0.0
    %290 = vmatpush2.msra.mxu0 0.0
    %291 = vmatprep.subr.mxu0 0.0
    %292 = vmatpush2.msra.mxu0 0.0
    %293 = vmatprep.subr.mxu0 0.0
    %294 = vmatpush2.msra.mxu0 0.0
    %295 = vmatprep.subr.mxu0 0.0
    %296 = vmatpush2.msra.mxu0 0.0
    %297 = vmatprep.subr.mxu0 0.0
    %298 = vmatpush2.msra.mxu0 0.0
    %299 = vmatprep.subr.mxu0 0.0
    %300 = vmatpush2.msra.mxu0 0.0
    %301 = vmatprep.subr.mxu0 0.0
    %302 = vmatpush2.msra.mxu0 0.0
    %303 = vmatprep.subr.mxu0 0.0
    %304 = vmatpush2.msra.mxu0 0.0
    %305 = vmatprep.subr.mxu0 0.0
    %306 = vmatpush2.msra.mxu0 0.0
    %307 = vmatprep.subr.mxu0 0.0
    %308 = vmatpush2.msra.mxu0 0.0
    %309 = vmatprep.subr.mxu0 0.0
    %310 = vmatpush2.msra.mxu0 0.0
    %311 = vmatprep.subr.mxu0 0.0
    %312 = vmatpush2.msra.mxu0 0.0
    %313 = vmatprep.subr.mxu0 0.0
    %314 = vmatpush2.msra.mxu0 0.0
    %315 = vmatprep.subr.mxu0 0.0
    %316 = vmatpush2.msra.mxu0 0.0
    %317 = vmatprep.subr.mxu0 0.0
    %318 = vmatpush2.msra.mxu0 0.0
    %319 = vmatprep.mubr.f32.mxu0 0.0
    %320 = vmatmul.mubr.f32.gmra.mxu0 %v253
    %v321 = vpop.f32.mrf.mxu0
    %v322 = vadd.f32 0.0, %v321
    %v323 = vpop.f32.mrf.mxu0
    %324 = vdwg.mxu0
    %325 = vmatprep.subr.mxu0 0.0
    %326 = vmatpush1.msra.mxu0 0.0
    %327 = vmatprep.subr.mxu0 0.0
    %328 = vmatpush1.msra.mxu0 0.0
    %329 = vmatprep.subr.mxu0 0.0
    %330 = vmatpush1.msra.mxu0 0.0
    %331 = vmatprep.subr.mxu0 0.0
    %332 = vmatpush1.msra.mxu0 0.0
    %333 = vmatprep.subr.mxu0 0.0
    %334 = vmatpush1.msra.mxu0 0.0
    %335 = vmatprep.subr.mxu0 0.0
    %336 = vmatpush1.msra.mxu0 0.0
    %337 = vmatprep.subr.mxu0 0.0
    %338 = vmatpush1.msra.mxu0 0.0
    %339 = vmatprep.subr.mxu0 0.0
    %340 = vmatpush1.msra.mxu0 0.0
    %341 = vmatprep.subr.mxu0 0.0
    %342 = vmatpush1.msra.mxu0 0.0
    %343 = vmatprep.subr.mxu0 0.0
    %344 = vmatpush1.msra.mxu0 0.0
    %345 = vmatprep.subr.mxu0 0.0
    %346 = vmatpush1.msra.mxu0 0.0
    %347 = vmatprep.subr.mxu0 0.0
    %348 = vmatpush1.msra.mxu0 %v102
    %349 = vmatprep.subr.mxu0 0.0
    %350 = vmatpush1.msra.mxu0 %v101
    %351 = vmatprep.subr.mxu0 0.0
    %352 = vmatpush1.msra.mxu0 %v100
    %353 = vmatprep.subr.mxu0 0.0
    %354 = vmatpush1.msra.mxu0 %v99
    %355 = vmatprep.subr.mxu0 0.0
    %356 = vmatpush1.msra.mxu0 %v98
    %357 = vmatprep.subr.mxu0 0.0
    %358 = vmatpush2.msra.mxu0 0.0
    %359 = vmatprep.subr.mxu0 0.0
    %360 = vmatpush2.msra.mxu0 0.0
    %361 = vmatprep.subr.mxu0 0.0
    %362 = vmatpush2.msra.mxu0 0.0
    %363 = vmatprep.subr.mxu0 0.0
    %364 = vmatpush2.msra.mxu0 0.0
    %365 = vmatprep.subr.mxu0 0.0
    %366 = vmatpush2.msra.mxu0 0.0
    %367 = vmatprep.subr.mxu0 0.0
    %368 = vmatpush2.msra.mxu0 0.0
    %369 = vmatprep.subr.mxu0 0.0
    %370 = vmatpush2.msra.mxu0 0.0
    %371 = vmatprep.subr.mxu0 0.0
    %372 = vmatpush2.msra.mxu0 0.0
    %373 = vmatprep.subr.mxu0 0.0
    %374 = vmatpush2.msra.mxu0 0.0
    %375 = vmatprep.subr.mxu0 0.0
    %376 = vmatpush2.msra.mxu0 0.0
    %377 = vmatprep.subr.mxu0 0.0
    %378 = vmatpush2.msra.mxu0 0.0
    %379 = vmatprep.subr.mxu0 0.0
    %380 = vmatpush2.msra.mxu0 0.0
    %381 = vmatprep.subr.mxu0 0.0
    %382 = vmatpush2.msra.mxu0 0.0
    %383 = vmatprep.subr.mxu0 0.0
    %384 = vmatpush2.msra.mxu0 0.0
    %385 = vmatprep.subr.mxu0 0.0
    %386 = vmatpush2.msra.mxu0 0.0
    %387 = vmatprep.subr.mxu0 0.0
    %388 = vmatpush2.msra.mxu0 0.0
    %389 = vmatprep.mubr.f32.mxu0 0.0
    %390 = vmatmul.mubr.f32.gmra.mxu0 %v253
    %v391 = vpop.f32.mrf.mxu0
    %v392 = vadd.f32 %v322, %v391
    %v393 = vpop.f32.mrf.mxu0
    %394 = vdwg.mxu0
    %v395 = vadd.f32 %v249, %v392
    %v396 = vld [vmem:[%s2] sm:$0x3]
    %v397 = vpack.c.bf16 %v396, %v396
    %v398 = vunpack.c.l.bf16 %v397
    %v399 = vsub.f32 %v396, %v398
    %v401 = vsel %vm108, %v398, 0
    %403 = vmatprep.subr.mxu0 0.0
    %404 = vmatpush1.msra.mxu0 0.0
    %405 = vmatprep.subr.mxu0 0.0
    %406 = vmatpush1.msra.mxu0 0.0
    %407 = vmatprep.subr.mxu0 0.0
    %408 = vmatpush1.msra.mxu0 0.0
    %409 = vmatprep.subr.mxu0 0.0
    %410 = vmatpush1.msra.mxu0 0.0
    %411 = vmatprep.subr.mxu0 0.0
    %412 = vmatpush1.msra.mxu0 0.0
    %413 = vmatprep.subr.mxu0 0.0
    %414 = vmatpush1.msra.mxu0 0.0
    %415 = vmatprep.subr.mxu0 0.0
    %416 = vmatpush1.msra.mxu0 0.0
    %417 = vmatprep.subr.mxu0 0.0
    %418 = vmatpush1.msra.mxu0 0.0
    %419 = vmatprep.subr.mxu0 0.0
    %420 = vmatpush1.msra.mxu0 0.0
    %421 = vmatprep.subr.mxu0 0.0
    %422 = vmatpush1.msra.mxu0 0.0
    %423 = vmatprep.subr.mxu0 0.0
    %424 = vmatpush1.msra.mxu0 0.0
    %425 = vmatprep.subr.mxu0 0.0
    %426 = vmatpush1.msra.mxu0 %v107
    %427 = vmatprep.subr.mxu0 0.0
    %428 = vmatpush1.msra.mxu0 %v106
    %429 = vmatprep.subr.mxu0 0.0
    %430 = vmatpush1.msra.mxu0 %v105
    %431 = vmatprep.subr.mxu0 0.0
    %432 = vmatpush1.msra.mxu0 %v104
    %433 = vmatprep.subr.mxu0 0.0
    %434 = vmatpush1.msra.mxu0 %v103
    %435 = vmatprep.subr.mxu0 0.0
    %436 = vmatpush2.msra.mxu0 0.0
    %437 = vmatprep.subr.mxu0 0.0
    %438 = vmatpush2.msra.mxu0 0.0
    %439 = vmatprep.subr.mxu0 0.0
    %440 = vmatpush2.msra.mxu0 0.0
    %441 = vmatprep.subr.mxu0 0.0
    %442 = vmatpush2.msra.mxu0 0.0
    %443 = vmatprep.subr.mxu0 0.0
    %444 = vmatpush2.msra.mxu0 0.0
    %445 = vmatprep.subr.mxu0 0.0
    %446 = vmatpush2.msra.mxu0 0.0
    %447 = vmatprep.subr.mxu0 0.0
    %448 = vmatpush2.msra.mxu0 0.0
    %449 = vmatprep.subr.mxu0 0.0
    %450 = vmatpush2.msra.mxu0 0.0
    %451 = vmatprep.subr.mxu0 0.0
    %452 = vmatpush2.msra.mxu0 0.0
    %453 = vmatprep.subr.mxu0 0.0
    %454 = vmatpush2.msra.mxu0 0.0
    %455 = vmatprep.subr.mxu0 0.0
    %456 = vmatpush2.msra.mxu0 0.0
    %457 = vmatprep.subr.mxu0 0.0
    %458 = vmatpush2.msra.mxu0 0.0
    %459 = vmatprep.subr.mxu0 0.0
    %460 = vmatpush2.msra.mxu0 0.0
    %461 = vmatprep.subr.mxu0 0.0
    %462 = vmatpush2.msra.mxu0 0.0
    %463 = vmatprep.subr.mxu0 0.0
    %464 = vmatpush2.msra.mxu0 0.0
    %465 = vmatprep.subr.mxu0 0.0
    %466 = vmatpush2.msra.mxu0 0.0
    %467 = vmatprep.mubr.f32.mxu0 0.0
    %468 = vmatmul.mubr.f32.gmra.mxu0 %v401
    %v469 = vpop.f32.mrf.mxu0
    %v470 = vadd.f32 0.0, %v469
    %v471 = vpop.f32.mrf.mxu0
    %472 = vdwg.mxu0
    %473 = vmatprep.subr.mxu0 0.0
    %474 = vmatpush1.msra.mxu0 0.0
    %475 = vmatprep.subr.mxu0 0.0
    %476 = vmatpush1.msra.mxu0 0.0
    %477 = vmatprep.subr.mxu0 0.0
    %478 = vmatpush1.msra.mxu0 0.0
    %479 = vmatprep.subr.mxu0 0.0
    %480 = vmatpush1.msra.mxu0 0.0
    %481 = vmatprep.subr.mxu0 0.0
    %482 = vmatpush1.msra.mxu0 0.0
    %483 = vmatprep.subr.mxu0 0.0
    %484 = vmatpush1.msra.mxu0 0.0
    %485 = vmatprep.subr.mxu0 0.0
    %486 = vmatpush1.msra.mxu0 0.0
    %487 = vmatprep.subr.mxu0 0.0
    %488 = vmatpush1.msra.mxu0 0.0
    %489 = vmatprep.subr.mxu0 0.0
    %490 = vmatpush1.msra.mxu0 0.0
    %491 = vmatprep.subr.mxu0 0.0
    %492 = vmatpush1.msra.mxu0 0.0
    %493 = vmatprep.subr.mxu0 0.0
    %494 = vmatpush1.msra.mxu0 0.0
    %495 = vmatprep.subr.mxu0 0.0
    %496 = vmatpush1.msra.mxu0 %v102
    %497 = vmatprep.subr.mxu0 0.0
    %498 = vmatpush1.msra.mxu0 %v101
    %499 = vmatprep.subr.mxu0 0.0
    %500 = vmatpush1.msra.mxu0 %v100
    %501 = vmatprep.subr.mxu0 0.0
    %502 = vmatpush1.msra.mxu0 %v99
    %503 = vmatprep.subr.mxu0 0.0
    %504 = vmatpush1.msra.mxu0 %v98
    %505 = vmatprep.subr.mxu0 0.0
    %506 = vmatpush2.msra.mxu0 0.0
    %507 = vmatprep.subr.mxu0 0.0
    %508 = vmatpush2.msra.mxu0 0.0
    %509 = vmatprep.subr.mxu0 0.0
    %510 = vmatpush2.msra.mxu0 0.0
    %511 = vmatprep.subr.mxu0 0.0
    %512 = vmatpush2.msra.mxu0 0.0
    %513 = vmatprep.subr.mxu0 0.0
    %514 = vmatpush2.msra.mxu0 0.0
    %515 = vmatprep.subr.mxu0 0.0
    %516 = vmatpush2.msra.mxu0 0.0
    %517 = vmatprep.subr.mxu0 0.0
    %518 = vmatpush2.msra.mxu0 0.0
    %519 = vmatprep.subr.mxu0 0.0
    %520 = vmatpush2.msra.mxu0 0.0
    %521 = vmatprep.subr.mxu0 0.0
    %522 = vmatpush2.msra.mxu0 0.0
    %523 = vmatprep.subr.mxu0 0.0
    %524 = vmatpush2.msra.mxu0 0.0
    %525 = vmatprep.subr.mxu0 0.0
    %526 = vmatpush2.msra.mxu0 0.0
    %527 = vmatprep.subr.mxu0 0.0
    %528 = vmatpush2.msra.mxu0 0.0
    %529 = vmatprep.subr.mxu0 0.0
    %530 = vmatpush2.msra.mxu0 0.0
    %531 = vmatprep.subr.mxu0 0.0
    %532 = vmatpush2.msra.mxu0 0.0
    %533 = vmatprep.subr.mxu0 0.0
    %534 = vmatpush2.msra.mxu0 0.0
    %535 = vmatprep.subr.mxu0 0.0
    %536 = vmatpush2.msra.mxu0 0.0
    %537 = vmatprep.mubr.f32.mxu0 0.0
    %538 = vmatmul.mubr.f32.gmra.mxu0 %v401
    %v539 = vpop.f32.mrf.mxu0
    %v540 = vadd.f32 %v470, %v539
    %v541 = vpop.f32.mrf.mxu0
    %542 = vdwg.mxu0
    %v544 = vsel %vm108, %v399, 0
    %546 = vmatprep.subr.mxu0 0.0
    %547 = vmatpush1.msra.mxu0 0.0
    %548 = vmatprep.subr.mxu0 0.0
    %549 = vmatpush1.msra.mxu0 0.0
    %550 = vmatprep.subr.mxu0 0.0
    %551 = vmatpush1.msra.mxu0 0.0
    %552 = vmatprep.subr.mxu0 0.0
    %553 = vmatpush1.msra.mxu0 0.0
    %554 = vmatprep.subr.mxu0 0.0
    %555 = vmatpush1.msra.mxu0 0.0
    %556 = vmatprep.subr.mxu0 0.0
    %557 = vmatpush1.msra.mxu0 0.0
    %558 = vmatprep.subr.mxu0 0.0
    %559 = vmatpush1.msra.mxu0 0.0
    %560 = vmatprep.subr.mxu0 0.0
    %561 = vmatpush1.msra.mxu0 0.0
    %562 = vmatprep.subr.mxu0 0.0
    %563 = vmatpush1.msra.mxu0 0.0
    %564 = vmatprep.subr.mxu0 0.0
    %565 = vmatpush1.msra.mxu0 0.0
    %566 = vmatprep.subr.mxu0 0.0
    %567 = vmatpush1.msra.mxu0 0.0
    %568 = vmatprep.subr.mxu0 0.0
    %569 = vmatpush1.msra.mxu0 %v107
    %570 = vmatprep.subr.mxu0 0.0
    %571 = vmatpush1.msra.mxu0 %v106
    %572 = vmatprep.subr.mxu0 0.0
    %573 = vmatpush1.msra.mxu0 %v105
    %574 = vmatprep.subr.mxu0 0.0
    %575 = vmatpush1.msra.mxu0 %v104
    %576 = vmatprep.subr.mxu0 0.0
    %577 = vmatpush1.msra.mxu0 %v103
    %578 = vmatprep.subr.mxu0 0.0
    %579 = vmatpush2.msra.mxu0 0.0
    %580 = vmatprep.subr.mxu0 0.0
    %581 = vmatpush2.msra.mxu0 0.0
    %582 = vmatprep.subr.mxu0 0.0
    %583 = vmatpush2.msra.mxu0 0.0
    %584 = vmatprep.subr.mxu0 0.0
    %585 = vmatpush2.msra.mxu0 0.0
    %586 = vmatprep.subr.mxu0 0.0
    %587 = vmatpush2.msra.mxu0 0.0
    %588 = vmatprep.subr.mxu0 0.0
    %589 = vmatpush2.msra.mxu0 0.0
    %590 = vmatprep.subr.mxu0 0.0
    %591 = vmatpush2.msra.mxu0 0.0
    %592 = vmatprep.subr.mxu0 0.0
    %593 = vmatpush2.msra.mxu0 0.0
    %594 = vmatprep.subr.mxu0 0.0
    %595 = vmatpush2.msra.mxu0 0.0
    %596 = vmatprep.subr.mxu0 0.0
    %597 = vmatpush2.msra.mxu0 0.0
    %598 = vmatprep.subr.mxu0 0.0
    %599 = vmatpush2.msra.mxu0 0.0
    %600 = vmatprep.subr.mxu0 0.0
    %601 = vmatpush2.msra.mxu0 0.0
    %602 = vmatprep.subr.mxu0 0.0
    %603 = vmatpush2.msra.mxu0 0.0
    %604 = vmatprep.subr.mxu0 0.0
    %605 = vmatpush2.msra.mxu0 0.0
    %606 = vmatprep.subr.mxu0 0.0
    %607 = vmatpush2.msra.mxu0 0.0
    %608 = vmatprep.subr.mxu0 0.0
    %609 = vmatpush2.msra.mxu0 0.0
    %610 = vmatprep.mubr.f32.mxu0 0.0
    %611 = vmatmul.mubr.f32.gmra.mxu0 %v544
    %v612 = vpop.f32.mrf.mxu0
    %v613 = vadd.f32 0.0, %v612
    %v614 = vpop.f32.mrf.mxu0
    %615 = vdwg.mxu0
    %616 = vmatprep.subr.mxu0 0.0
    %617 = vmatpush1.msra.mxu0 0.0
    %618 = vmatprep.subr.mxu0 0.0
    %619 = vmatpush1.msra.mxu0 0.0
    %620 = vmatprep.subr.mxu0 0.0
    %621 = vmatpush1.msra.mxu0 0.0
    %622 = vmatprep.subr.mxu0 0.0
    %623 = vmatpush1.msra.mxu0 0.0
    %624 = vmatprep.subr.mxu0 0.0
    %625 = vmatpush1.msra.mxu0 0.0
    %626 = vmatprep.subr.mxu0 0.0
    %627 = vmatpush1.msra.mxu0 0.0
    %628 = vmatprep.subr.mxu0 0.0
    %629 = vmatpush1.msra.mxu0 0.0
    %630 = vmatprep.subr.mxu0 0.0
    %631 = vmatpush1.msra.mxu0 0.0
    %632 = vmatprep.subr.mxu0 0.0
    %633 = vmatpush1.msra.mxu0 0.0
    %634 = vmatprep.subr.mxu0 0.0
    %635 = vmatpush1.msra.mxu0 0.0
    %636 = vmatprep.subr.mxu0 0.0
    %637 = vmatpush1.msra.mxu0 0.0
    %638 = vmatprep.subr.mxu0 0.0
    %639 = vmatpush1.msra.mxu0 %v102
    %640 = vmatprep.subr.mxu0 0.0
    %641 = vmatpush1.msra.mxu0 %v101
    %642 = vmatprep.subr.mxu0 0.0
    %643 = vmatpush1.msra.mxu0 %v100
    %644 = vmatprep.subr.mxu0 0.0
    %645 = vmatpush1.msra.mxu0 %v99
    %646 = vmatprep.subr.mxu0 0.0
    %647 = vmatpush1.msra.mxu0 %v98
    %648 = vmatprep.subr.mxu0 0.0
    %649 = vmatpush2.msra.mxu0 0.0
    %650 = vmatprep.subr.mxu0 0.0
    %651 = vmatpush2.msra.mxu0 0.0
    %652 = vmatprep.subr.mxu0 0.0
    %653 = vmatpush2.msra.mxu0 0.0
    %654 = vmatprep.subr.mxu0 0.0
    %655 = vmatpush2.msra.mxu0 0.0
    %656 = vmatprep.subr.mxu0 0.0
    %657 = vmatpush2.msra.mxu0 0.0
    %658 = vmatprep.subr.mxu0 0.0
    %659 = vmatpush2.msra.mxu0 0.0
    %660 = vmatprep.subr.mxu0 0.0
    %661 = vmatpush2.msra.mxu0 0.0
    %662 = vmatprep.subr.mxu0 0.0
    %663 = vmatpush2.msra.mxu0 0.0
    %664 = vmatprep.subr.mxu0 0.0
    %665 = vmatpush2.msra.mxu0 0.0
    %666 = vmatprep.subr.mxu0 0.0
    %667 = vmatpush2.msra.mxu0 0.0
    %668 = vmatprep.subr.mxu0 0.0
    %669 = vmatpush2.msra.mxu0 0.0
    %670 = vmatprep.subr.mxu0 0.0
    %671 = vmatpush2.msra.mxu0 0.0
    %672 = vmatprep.subr.mxu0 0.0
    %673 = vmatpush2.msra.mxu0 0.0
    %674 = vmatprep.subr.mxu0 0.0
    %675 = vmatpush2.msra.mxu0 0.0
    %676 = vmatprep.subr.mxu0 0.0
    %677 = vmatpush2.msra.mxu0 0.0
    %678 = vmatprep.subr.mxu0 0.0
    %679 = vmatpush2.msra.mxu0 0.0
    %680 = vmatprep.mubr.f32.mxu0 0.0
    %681 = vmatmul.mubr.f32.gmra.mxu0 %v544
    %v682 = vpop.f32.mrf.mxu0
    %v683 = vadd.f32 %v613, %v682
    %v684 = vpop.f32.mrf.mxu0
    %685 = vdwg.mxu0
    %v686 = vadd.f32 %v540, %v683
    %v687 = vld [vmem:[#allocation3] sm:$0x3]
    %v688 = vpack.c.bf16 %v687, %v687
    %v689 = vunpack.c.l.bf16 %v688
    %v690 = vsub.f32 %v687, %v689
    %v691 = vpack.c.bf16 %v87, %v86
    %v692 = vpack.c.bf16 %v89, %v88
    %v693 = vpack.c.bf16 %v90, %v90
    %v694 = vunpack.c.l.bf16 %v691
    %v695 = vunpack.c.h.bf16 %v691
    %v696 = vunpack.c.l.bf16 %v692
    %v697 = vunpack.c.h.bf16 %v692
    %v698 = vunpack.c.l.bf16 %v693
    %v699 = vsub.f32 %v86, %v694
    %v700 = vsub.f32 %v87, %v695
    %v701 = vsub.f32 %v88, %v696
    %v702 = vsub.f32 %v89, %v697
    %v703 = vsub.f32 %v90, %v698
    %v705 = vsel %vm108, %v689, 0
    %707 = vmatprep.subr.mxu0 0.0
    %708 = vmatpush1.msra.mxu0 0.0
    %709 = vmatprep.subr.mxu0 0.0
    %710 = vmatpush1.msra.mxu0 0.0
    %711 = vmatprep.subr.mxu0 0.0
    %712 = vmatpush1.msra.mxu0 0.0
    %713 = vmatprep.subr.mxu0 0.0
    %714 = vmatpush1.msra.mxu0 0.0
    %715 = vmatprep.subr.mxu0 0.0
    %716 = vmatpush1.msra.mxu0 0.0
    %717 = vmatprep.subr.mxu0 0.0
    %718 = vmatpush1.msra.mxu0 0.0
    %719 = vmatprep.subr.mxu0 0.0
    %720 = vmatpush1.msra.mxu0 0.0
    %721 = vmatprep.subr.mxu0 0.0
    %722 = vmatpush1.msra.mxu0 0.0
    %723 = vmatprep.subr.mxu0 0.0
    %724 = vmatpush1.msra.mxu0 0.0
    %725 = vmatprep.subr.mxu0 0.0
    %726 = vmatpush1.msra.mxu0 0.0
    %727 = vmatprep.subr.mxu0 0.0
    %728 = vmatpush1.msra.mxu0 0.0
    %729 = vmatprep.subr.mxu0 0.0
    %730 = vmatpush1.msra.mxu0 %v703
    %731 = vmatprep.subr.mxu0 0.0
    %732 = vmatpush1.msra.mxu0 %v702
    %733 = vmatprep.subr.mxu0 0.0
    %734 = vmatpush1.msra.mxu0 %v701
    %735 = vmatprep.subr.mxu0 0.0
    %736 = vmatpush1.msra.mxu0 %v700
    %737 = vmatprep.subr.mxu0 0.0
    %738 = vmatpush1.msra.mxu0 %v699
    %739 = vmatprep.subr.mxu0 0.0
    %740 = vmatpush2.msra.mxu0 0.0
    %741 = vmatprep.subr.mxu0 0.0
    %742 = vmatpush2.msra.mxu0 0.0
    %743 = vmatprep.subr.mxu0 0.0
    %744 = vmatpush2.msra.mxu0 0.0
    %745 = vmatprep.subr.mxu0 0.0
    %746 = vmatpush2.msra.mxu0 0.0
    %747 = vmatprep.subr.mxu0 0.0
    %748 = vmatpush2.msra.mxu0 0.0
    %749 = vmatprep.subr.mxu0 0.0
    %750 = vmatpush2.msra.mxu0 0.0
    %751 = vmatprep.subr.mxu0 0.0
    %752 = vmatpush2.msra.mxu0 0.0
    %753 = vmatprep.subr.mxu0 0.0
    %754 = vmatpush2.msra.mxu0 0.0
    %755 = vmatprep.subr.mxu0 0.0
    %756 = vmatpush2.msra.mxu0 0.0
    %757 = vmatprep.subr.mxu0 0.0
    %758 = vmatpush2.msra.mxu0 0.0
    %759 = vmatprep.subr.mxu0 0.0
    %760 = vmatpush2.msra.mxu0 0.0
    %761 = vmatprep.subr.mxu0 0.0
    %762 = vmatpush2.msra.mxu0 0.0
    %763 = vmatprep.subr.mxu0 0.0
    %764 = vmatpush2.msra.mxu0 0.0
    %765 = vmatprep.subr.mxu0 0.0
    %766 = vmatpush2.msra.mxu0 0.0
    %767 = vmatprep.subr.mxu0 0.0
    %768 = vmatpush2.msra.mxu0 0.0
    %769 = vmatprep.subr.mxu0 0.0
    %770 = vmatpush2.msra.mxu0 0.0
    %771 = vmatprep.mubr.f32.mxu0 0.0
    %772 = vmatmul.mubr.f32.gmra.mxu0 %v705
    %v773 = vpop.f32.mrf.mxu0
    %v774 = vadd.f32 0.0, %v773
    %v775 = vpop.f32.mrf.mxu0
    %776 = vdwg.mxu0
    %777 = vmatprep.subr.mxu0 0.0
    %778 = vmatpush1.msra.mxu0 0.0
    %779 = vmatprep.subr.mxu0 0.0
    %780 = vmatpush1.msra.mxu0 0.0
    %781 = vmatprep.subr.mxu0 0.0
    %782 = vmatpush1.msra.mxu0 0.0
    %783 = vmatprep.subr.mxu0 0.0
    %784 = vmatpush1.msra.mxu0 0.0
    %785 = vmatprep.subr.mxu0 0.0
    %786 = vmatpush1.msra.mxu0 0.0
    %787 = vmatprep.subr.mxu0 0.0
    %788 = vmatpush1.msra.mxu0 0.0
    %789 = vmatprep.subr.mxu0 0.0
    %790 = vmatpush1.msra.mxu0 0.0
    %791 = vmatprep.subr.mxu0 0.0
    %792 = vmatpush1.msra.mxu0 0.0
    %793 = vmatprep.subr.mxu0 0.0
    %794 = vmatpush1.msra.mxu0 0.0
    %795 = vmatprep.subr.mxu0 0.0
    %796 = vmatpush1.msra.mxu0 0.0
    %797 = vmatprep.subr.mxu0 0.0
    %798 = vmatpush1.msra.mxu0 0.0
    %799 = vmatprep.subr.mxu0 0.0
    %800 = vmatpush1.msra.mxu0 %v698
    %801 = vmatprep.subr.mxu0 0.0
    %802 = vmatpush1.msra.mxu0 %v697
    %803 = vmatprep.subr.mxu0 0.0
    %804 = vmatpush1.msra.mxu0 %v696
    %805 = vmatprep.subr.mxu0 0.0
    %806 = vmatpush1.msra.mxu0 %v695
    %807 = vmatprep.subr.mxu0 0.0
    %808 = vmatpush1.msra.mxu0 %v694
    %809 = vmatprep.subr.mxu0 0.0
    %810 = vmatpush2.msra.mxu0 0.0
    %811 = vmatprep.subr.mxu0 0.0
    %812 = vmatpush2.msra.mxu0 0.0
    %813 = vmatprep.subr.mxu0 0.0
    %814 = vmatpush2.msra.mxu0 0.0
    %815 = vmatprep.subr.mxu0 0.0
    %816 = vmatpush2.msra.mxu0 0.0
    %817 = vmatprep.subr.mxu0 0.0
    %818 = vmatpush2.msra.mxu0 0.0
    %819 = vmatprep.subr.mxu0 0.0
    %820 = vmatpush2.msra.mxu0 0.0
    %821 = vmatprep.subr.mxu0 0.0
    %822 = vmatpush2.msra.mxu0 0.0
    %823 = vmatprep.subr.mxu0 0.0
    %824 = vmatpush2.msra.mxu0 0.0
    %825 = vmatprep.subr.mxu0 0.0
    %826 = vmatpush2.msra.mxu0 0.0
    %827 = vmatprep.subr.mxu0 0.0
    %828 = vmatpush2.msra.mxu0 0.0
    %829 = vmatprep.subr.mxu0 0.0
    %830 = vmatpush2.msra.mxu0 0.0
    %831 = vmatprep.subr.mxu0 0.0
    %832 = vmatpush2.msra.mxu0 0.0
    %833 = vmatprep.subr.mxu0 0.0
    %834 = vmatpush2.msra.mxu0 0.0
    %835 = vmatprep.subr.mxu0 0.0
    %836 = vmatpush2.msra.mxu0 0.0
    %837 = vmatprep.subr.mxu0 0.0
    %838 = vmatpush2.msra.mxu0 0.0
    %839 = vmatprep.subr.mxu0 0.0
    %840 = vmatpush2.msra.mxu0 0.0
    %841 = vmatprep.mubr.f32.mxu0 0.0
    %842 = vmatmul.mubr.f32.gmra.mxu0 %v705
    %v843 = vpop.f32.mrf.mxu0
    %v844 = vadd.f32 %v774, %v843
    %v845 = vpop.f32.mrf.mxu0
    %846 = vdwg.mxu0
    %v848 = vsel %vm108, %v690, 0
    %850 = vmatprep.subr.mxu0 0.0
    %851 = vmatpush1.msra.mxu0 0.0
    %852 = vmatprep.subr.mxu0 0.0
    %853 = vmatpush1.msra.mxu0 0.0
    %854 = vmatprep.subr.mxu0 0.0
    %855 = vmatpush1.msra.mxu0 0.0
    %856 = vmatprep.subr.mxu0 0.0
    %857 = vmatpush1.msra.mxu0 0.0
    %858 = vmatprep.subr.mxu0 0.0
    %859 = vmatpush1.msra.mxu0 0.0
    %860 = vmatprep.subr.mxu0 0.0
    %861 = vmatpush1.msra.mxu0 0.0
    %862 = vmatprep.subr.mxu0 0.0
    %863 = vmatpush1.msra.mxu0 0.0
    %864 = vmatprep.subr.mxu0 0.0
    %865 = vmatpush1.msra.mxu0 0.0
    %866 = vmatprep.subr.mxu0 0.0
    %867 = vmatpush1.msra.mxu0 0.0
    %868 = vmatprep.subr.mxu0 0.0
    %869 = vmatpush1.msra.mxu0 0.0
    %870 = vmatprep.subr.mxu0 0.0
    %871 = vmatpush1.msra.mxu0 0.0
    %872 = vmatprep.subr.mxu0 0.0
    %873 = vmatpush1.msra.mxu0 %v703
    %874 = vmatprep.subr.mxu0 0.0
    %875 = vmatpush1.msra.mxu0 %v702
    %876 = vmatprep.subr.mxu0 0.0
    %877 = vmatpush1.msra.mxu0 %v701
    %878 = vmatprep.subr.mxu0 0.0
    %879 = vmatpush1.msra.mxu0 %v700
    %880 = vmatprep.subr.mxu0 0.0
    %881 = vmatpush1.msra.mxu0 %v699
    %882 = vmatprep.subr.mxu0 0.0
    %883 = vmatpush2.msra.mxu0 0.0
    %884 = vmatprep.subr.mxu0 0.0
    %885 = vmatpush2.msra.mxu0 0.0
    %886 = vmatprep.subr.mxu0 0.0
    %887 = vmatpush2.msra.mxu0 0.0
    %888 = vmatprep.subr.mxu0 0.0
    %889 = vmatpush2.msra.mxu0 0.0
    %890 = vmatprep.subr.mxu0 0.0
    %891 = vmatpush2.msra.mxu0 0.0
    %892 = vmatprep.subr.mxu0 0.0
    %893 = vmatpush2.msra.mxu0 0.0
    %894 = vmatprep.subr.mxu0 0.0
    %895 = vmatpush2.msra.mxu0 0.0
    %896 = vmatprep.subr.mxu0 0.0
    %897 = vmatpush2.msra.mxu0 0.0
    %898 = vmatprep.subr.mxu0 0.0
    %899 = vmatpush2.msra.mxu0 0.0
    %900 = vmatprep.subr.mxu0 0.0
    %901 = vmatpush2.msra.mxu0 0.0
    %902 = vmatprep.subr.mxu0 0.0
    %903 = vmatpush2.msra.mxu0 0.0
    %904 = vmatprep.subr.mxu0 0.0
    %905 = vmatpush2.msra.mxu0 0.0
    %906 = vmatprep.subr.mxu0 0.0
    %907 = vmatpush2.msra.mxu0 0.0
    %908 = vmatprep.subr.mxu0 0.0
    %909 = vmatpush2.msra.mxu0 0.0
    %910 = vmatprep.subr.mxu0 0.0
    %911 = vmatpush2.msra.mxu0 0.0
    %912 = vmatprep.subr.mxu0 0.0
    %913 = vmatpush2.msra.mxu0 0.0
    %914 = vmatprep.mubr.f32.mxu0 0.0
    %915 = vmatmul.mubr.f32.gmra.mxu0 %v848
    %v916 = vpop.f32.mrf.mxu0
    %v917 = vadd.f32 0.0, %v916
    %v918 = vpop.f32.mrf.mxu0
    %919 = vdwg.mxu0
    %920 = vmatprep.subr.mxu0 0.0
    %921 = vmatpush1.msra.mxu0 0.0
    %922 = vmatprep.subr.mxu0 0.0
    %923 = vmatpush1.msra.mxu0 0.0
    %924 = vmatprep.subr.mxu0 0.0
    %925 = vmatpush1.msra.mxu0 0.0
    %926 = vmatprep.subr.mxu0 0.0
    %927 = vmatpush1.msra.mxu0 0.0
    %928 = vmatprep.subr.mxu0 0.0
    %929 = vmatpush1.msra.mxu0 0.0
    %930 = vmatprep.subr.mxu0 0.0
    %931 = vmatpush1.msra.mxu0 0.0
    %932 = vmatprep.subr.mxu0 0.0
    %933 = vmatpush1.msra.mxu0 0.0
    %934 = vmatprep.subr.mxu0 0.0
    %935 = vmatpush1.msra.mxu0 0.0
    %936 = vmatprep.subr.mxu0 0.0
    %937 = vmatpush1.msra.mxu0 0.0
    %938 = vmatprep.subr.mxu0 0.0
    %939 = vmatpush1.msra.mxu0 0.0
    %940 = vmatprep.subr.mxu0 0.0
    %941 = vmatpush1.msra.mxu0 0.0
    %942 = vmatprep.subr.mxu0 0.0
    %943 = vmatpush1.msra.mxu0 %v698
    %944 = vmatprep.subr.mxu0 0.0
    %945 = vmatpush1.msra.mxu0 %v697
    %946 = vmatprep.subr.mxu0 0.0
    %947 = vmatpush1.msra.mxu0 %v696
    %948 = vmatprep.subr.mxu0 0.0
    %949 = vmatpush1.msra.mxu0 %v695
    %950 = vmatprep.subr.mxu0 0.0
    %951 = vmatpush1.msra.mxu0 %v694
    %952 = vmatprep.subr.mxu0 0.0
    %953 = vmatpush2.msra.mxu0 0.0
    %954 = vmatprep.subr.mxu0 0.0
    %955 = vmatpush2.msra.mxu0 0.0
    %956 = vmatprep.subr.mxu0 0.0
    %957 = vmatpush2.msra.mxu0 0.0
    %958 = vmatprep.subr.mxu0 0.0
    %959 = vmatpush2.msra.mxu0 0.0
    %960 = vmatprep.subr.mxu0 0.0
    %961 = vmatpush2.msra.mxu0 0.0
    %962 = vmatprep.subr.mxu0 0.0
    %963 = vmatpush2.msra.mxu0 0.0
    %964 = vmatprep.subr.mxu0 0.0
    %965 = vmatpush2.msra.mxu0 0.0
    %966 = vmatprep.subr.mxu0 0.0
    %967 = vmatpush2.msra.mxu0 0.0
    %968 = vmatprep.subr.mxu0 0.0
    %969 = vmatpush2.msra.mxu0 0.0
    %970 = vmatprep.subr.mxu0 0.0
    %971 = vmatpush2.msra.mxu0 0.0
    %972 = vmatprep.subr.mxu0 0.0
    %973 = vmatpush2.msra.mxu0 0.0
    %974 = vmatprep.subr.mxu0 0.0
    %975 = vmatpush2.msra.mxu0 0.0
    %976 = vmatprep.subr.mxu0 0.0
    %977 = vmatpush2.msra.mxu0 0.0
    %978 = vmatprep.subr.mxu0 0.0
    %979 = vmatpush2.msra.mxu0 0.0
    %980 = vmatprep.subr.mxu0 0.0
    %981 = vmatpush2.msra.mxu0 0.0
    %982 = vmatprep.subr.mxu0 0.0
    %983 = vmatpush2.msra.mxu0 0.0
    %984 = vmatprep.mubr.f32.mxu0 0.0
    %985 = vmatmul.mubr.f32.gmra.mxu0 %v848
    %v986 = vpop.f32.mrf.mxu0
    %v987 = vadd.f32 %v917, %v986
    %v988 = vpop.f32.mrf.mxu0
    %989 = vdwg.mxu0
    %v990 = vadd.f32 %v844, %v987
    %v991 = vld [vmem:[#allocation2] sm:$0x3]
    %993 = vset.pattern.permute.xlu0 0
    %994 = vperm.xlu0 %993, %v991
    %v995 = vpop.permute.xlu0 %994
    %v997 = vadd.f32 %v995, %v990
    %v998 = vmul.f32 %v997, 0.15915494
    %v999 = vfloor.f32 %v998
    %v1000 = vmul.f32 %v999, 6.2831855
    %v1001 = vsub.f32 %v997, %v1000
    %1003 = vrot.lane.b32.xlu0 %v1001, 1
    %v1004 = vpop.permute.xlu0 %1003
    %vm1006 = vcmask 1024
    %1007 = vst.msk [vmem:[#allocation2] sm:$0x3] %vm1006, %v1004
    %v1008 = vand.u32 2147483647, %v997
    %vm1009 = vcmp.le.f32.partialorder %v1008, 0.7853982
    %vm1010 = vcmp.lt.s32.totalorder %v997, 0
    %v1011 = vand.u32 %v997, 2139095040
    %v1012 = vshrl.u32 %v1011, 23
    %v1013 = vsub.s32 %v1012, 127
    %v1014 = vand.u32 2147483647, %v997
    %v1015 = vand.u32 %v1014, 8388607
    %v1016 = vor.u32 %v1015, 8388608
    %v1017 = vsub.s32 0, %v1016
    %v1018 = vadd.s32 %v1013, 1
    %vm1019 = vcmp.gt.s32.totalorder %v1018, 0
    %v1020 = vsel %vm1019, %v1018, 0
    %v1021 = vshrl.u32 %v1020, 5
    %v1022 = vand.u32 %v1020, 31
    %v1023 = vsub.s32 32, %v1022
    %v1024 = vshrl.u32 683565275, %v1023
    %v1025 = vshll.u32 683565275, %v1022
    %v1026 = vshrl.u32 2475754826, %v1023
    %v1027 = vor.u32 %v1025, %v1026
    %v1028 = vshll.u32 2475754826, %v1022
    %v1029 = vshrl.u32 2131351028, %v1023
    %v1030 = vor.u32 %v1028, %v1029
    %v1031 = vshll.u32 2131351028, %v1022
    %v1032 = vshrl.u32 2102212464, %v1023
    %v1033 = vor.u32 %v1031, %v1032
    %v1034 = vshll.u32 2102212464, %v1022
    %v1035 = vshrl.u32 920167782, %v1023
    %v1036 = vor.u32 %v1034, %v1035
    %v1037 = vshll.u32 920167782, %v1022
    %v1038 = vshrl.u32 1326507024, %v1023
    %v1039 = vor.u32 %v1037, %v1038
    %vm1040 = vcmp.lt.s32.totalorder %v1021, 1
    %vm1041 = vcmp.lt.s32.totalorder %v1021, 2
    %vm1042 = vcmp.lt.s32.totalorder %v1021, 3
    %vm1043 = vcmp.lt.s32.totalorder %v1021, 4
    %v1044 = vsel %vm1040, %v1024, %v1027
    %v1045 = vsel %vm1043, %v1033, 2102212464
    %v1046 = vsel %vm1042, %v1030, %v1045
    %v1047 = vsel %vm1041, %v1044, %v1046
    %v1048 = vsel %vm1040, %v1027, %v1030
    %v1049 = vsel %vm1043, %v1036, 920167782
    %v1050 = vsel %vm1042, %v1033, %v1049
    %v1051 = vsel %vm1041, %v1048, %v1050
    %v1052 = vsel %vm1040, %v1030, %v1033
    %v1053 = vsel %vm1043, %v1039, 1326507024
    %v1054 = vsel %vm1042, %v1036, %v1053
    %v1055 = vsel %vm1041, %v1052, %v1054
    %v1056 = vshll.u32 %v1016, 8
    %v1057 = vmul.u32.u64.compose %v1056, %v1055
    %v1058 = vextract.low.u32 %v1057
    %v1059 = vextract.high.u32 %v1057
    %v1060 = vmul.u32.u64.compose %v1056, %v1051
    %v1061 = vextract.low.u32 %v1060
    %v1062 = vextract.high.u32 %v1060
    %v1063 = vmul.u32 %v1056, %v1047
    %v1064 = vadd.s32 %v1059, %v1061
    %vm1065 = vc.u32 %v1059, %v1061
    %v1066 = vadd.s32 %v1062, 1
    %v1067 = vsel %vm1065, %v1066, %v1062
    %v1068 = vadd.s32 %v1063, %v1067
    %v1069 = vadd.s32 %v1068, 536870912
    %v1070 = vshrl.u32 %v1069, 30
    %v1071 = vshll.u32 %v1070, 30
    %v1072 = vsub.s32 %v1068, %v1071
    %vm1073 = vcmp.lt.s32.totalorder %v1072, 0
    %v1074 = vsub.s32 0, %v1072
    %v1075 = vsel %vm1073, %v1074, %v1072
    %v1076 = vclz %v1075
    %v1077 = vsub.s32 %v1076, 2
    %vm1078 = vcmp.gt.s32.totalorder 0, %v1077
    %v1079 = vsel %vm1078, 0, %v1077
    %v1080 = vsub.s32 32, %v1079
    %v1081 = vshll.u32 %v1072, %v1079
    %v1082 = vshrl.u32 %v1064, %v1080
    %v1083 = vor.u32 %v1081, %v1082
    %v1084 = vsub.s32 4294967266, %v1079
    %v1085 = vadd.s32 %v1084, 127
    %v1086 = vshll.u32 %v1085, 23
    %v1087 = vor.u32 4788187, %v1086
    %v1088 = vand.u32 2147483647, %v1087
    %v1090 = vcvt.s32.f32 %v1083
    %v1091 = vmul.f32 %v1090, %v1088
    %v1092 = vxor.u32 %v1091, 2147483648
    %v1093 = vsel %vm1010, %v1092, %v1091
    %v1094 = vsub.s32 4, %v1070
    %v1095 = vsel %vm1010, %v1094, %v1070
    %v1096 = vsel %vm1009, %v997, %v1093
    %v1097 = vsel %vm1009, 0, %v1095
    %v1098 = vcosq.f32.pop %v1096
    %v1099 = vsinq.f32.pop %v1096
    %vm1100 = vweird.f32 %v997
    %v1101 = vadd.s32 %v1097, 3
    %v1102 = vand.u32 %v1101, 3
    %vm1103 = vcmp.lt.s32.totalorder %v1102, 2
    %vm1104 = vcmp.eq.s32.totalorder %v1102, 0
    %v1105 = vxor.u32 %v1099, 2147483648
    %v1106 = vsel %vm1104, %v1098, %v1105
    %vm1107 = vcmp.eq.s32.totalorder %v1102, 2
    %v1108 = vxor.u32 %v1098, 2147483648
    %v1109 = vsel %vm1107, %v1108, %v1099
    %v1110 = vsel %vm1103, %v1106, %v1109
    %v1111 = vsel %vm1100, nan, %v1110
    %v1112 = vmul.f32 %v395, %v1111
    %v1113 = vld [vmem:[%s5] sm:$0x3]
    %v1114 = vmul.f32 %v686, %v1113
    %v1115 = vadd.f32 %v1112, %v1114
    %1116 = vst [vmem:[#allocation11] sm:$0x3] %v1115
    // Predicated region
    $region46: #{tpu_custom_call.1} parent=1 // pred_check
      _
    $region47: #{tpu_custom_call.1} parent=1 // pred_check_branch
      %1118 = sbr.rel (0) target = $region49
    $region48: #{tpu_custom_call.1} parent=1 // pred_region
      %s1120 = ssub.s32 32, 32
      %1121 = vsyncadd [#allocation5], %s1120
      %s1123 = sshll.u32 [#allocation11], 4
      %s1124 = int_to_ptr.vmem [resolvable:$true] %s1123
      %1126 = dma.vmem_to_hbm [thread:$0]  %s1124, 32, %s6, [#allocation5]
    $region49: #{tpu_custom_call.1} parent=1 // pred_fallthru
      _
    // Predicated region
    $region50: #{tpu_custom_call.1} parent=1 // pred_check
      _
    $region51: #{tpu_custom_call.1} parent=1 // pred_check_branch
      %1128 = sbr.rel (0) target = $region53
    $region52: #{tpu_custom_call.1} parent=1 // pred_region
      %1129 = dma.done [#allocation5], 32
    $region53: #{tpu_custom_call.1} parent=1 // pred_fallthru
      _
    %1130 = vsyncpa [#allocation4], 1
    %1131 = vsyncpa [#allocation7], 1
    %1132 = vsyncpa [#allocation10], 1
    %1133 = vsyncpa [#allocation5], 1

</llo_original>
